<compile_context>
chip_gen: v5e
topology: v5e:2x2
jax: 0.10.0
libtpu: 0.0.40
codegen_flags: <defaults>
</compile_context>

<pallas_src>
import functools

import jax
import jax.numpy as jnp
from jax.experimental import pallas as pl
from jax.experimental.pallas import tpu as pltpu

LANE = 128


def _round_up(v, m):
    return ((v + m - 1) // m) * m


def dec_kernel(x_ref, w1_ref, b1_ref, w2_ref, b2_ref, ct_ref, csq_ref, out_ref,
               *, alpha):
    # ---- encoder: Linear -> ReLU -> Linear (MXU matmuls, f32 accumulate) ----
    h = jnp.dot(x_ref[...], w1_ref[...],
                preferred_element_type=jnp.float32) + b1_ref[...]      # (TN, Hm)
    h = jnp.maximum(h, 0.0)
    z = jnp.dot(h.astype(w2_ref.dtype), w2_ref[...],
                preferred_element_type=jnp.float32) + b2_ref[...]      # (TN, H)

    # ---- ClusterAssignment (Student's t soft assignment) ----
    #   ||z - c||^2 = ||z||^2 + ||c||^2 - 2 z . c      (cross term on the MXU)
    # centers arrive pre-transposed (H, K_pad); csq is ||c||^2 with padded
    # lanes preset to +1e30 so padded clusters vanish (no in-kernel iota/mask).
    # The cross matmul stays in f32 (tiny) to avoid cancellation near centers.
    z_sq = jnp.sum(z * z, axis=-1, keepdims=True)                      # (TN, 1)
    cross = jnp.dot(z, ct_ref[...],
                    preferred_element_type=jnp.float32)                # (TN, Kp)
    norm_sq = jnp.maximum(z_sq + csq_ref[...] - 2.0 * cross, 0.0)      # (TN, Kp)

    t = 1.0 + norm_sq * (1.0 / alpha)
    if alpha == 1.0:
        # power == 1 -> no pow; approx EUP reciprocal + one Newton step.
        num = pl.reciprocal(t, approx=True)
        num = num * (2.0 - t * num)
    else:
        power = (alpha + 1.0) / 2.0
        num = jnp.exp(-power * jnp.log(t))     # single fused log/exp on the EUP

    denom = jnp.sum(num, axis=-1, keepdims=True)                       # (TN, 1)
    inv = pl.reciprocal(denom, approx=True)
    inv = inv * (2.0 - denom * inv)            # Newton step -> ~f32-exact
    out_ref[...] = (num * inv).astype(out_ref.dtype)                   # (TN, Kp)


def _vmem_limit_bytes():
    """Per-generation scoped-VMEM budget: v5e/v6e have 128 MiB, v7x 64 MiB/TC."""
    cap = None
    try:
        cap = getattr(pltpu.get_tpu_info(), "vmem_capacity_bytes", None)
    except Exception:
        cap = None
    if cap is None or cap >= 100 * 1024 * 1024:
        return 96 * 1024 * 1024      # v5e / v6e
    return 48 * 1024 * 1024          # v7x: leave headroom under 64 MiB per TC


def dec_forward(x, w1, b1, w2, b2, centers, alpha=1.0, *,
                block_n=None, mxu_dtype=jnp.bfloat16, out_dtype=jnp.float32,
                x_buffers=None):
    N, D = x.shape
    H_mid = w1.shape[1]
    H = w2.shape[1]
    K = centers.shape[0]

    # Batch tile: multiple of 8 sublanes, up to 1024 rows (amortizes ~0.35us
    # per-step overhead), but keep >=2 grid steps so v7x's second TC gets work.
    if block_n is None:
        block_n = min(1024, max(8, N // 2))
    block_n = _round_up(block_n, 8)
    n_pad = block_n * (-(-N // block_n))
    if n_pad != N:
        x = jnp.pad(x, ((0, n_pad - N), (0, 0)))

    # Zero-pad hidden widths / cluster axis to lane multiples (numerically
    # inert through ReLU, the second matmul and the gram-trick distance).
    Hm_p = _round_up(H_mid, LANE)
    H_p = _round_up(H, LANE)
    K_p = max(LANE, _round_up(K, LANE))

    w1_p = jnp.zeros((D, Hm_p), jnp.float32).at[:, :H_mid].set(w1)
    b1_p = jnp.zeros((1, Hm_p), jnp.float32).at[:, :H_mid].set(b1.reshape(1, H_mid))
    w2_p = jnp.zeros((Hm_p, H_p), jnp.float32).at[:H_mid, :H].set(w2)
    b2_p = jnp.zeros((1, H_p), jnp.float32).at[:, :H].set(b2.reshape(1, H))
    ct = jnp.zeros((H_p, K_p), jnp.float32).at[:H, :K].set(centers.T)
    # ||c||^2 with padded lanes preset huge so their numerator underflows to ~0.
    csq = jnp.full((1, K_p), 1e30, jnp.float32).at[:, :K].set(
        jnp.sum(centers * centers, axis=1)[None, :])

    # MXU-operand casts done once here (not per grid step inside the kernel).
    x_p = x.astype(mxu_dtype)
    w1_p = w1_p.astype(mxu_dtype)
    w2_p = w2_p.astype(mxu_dtype)

    grid = (n_pad // block_n,)
    kernel = functools.partial(dec_kernel, alpha=float(alpha))
    params = pltpu.CompilerParams(
        dimension_semantics=("parallel",),     # shard batch over 2 TCs on v7x
        vmem_limit_bytes=_vmem_limit_bytes(),
    )

    def run(single_buffer_consts):
        def const_spec(shape):
            if single_buffer_consts:
                return pl.BlockSpec(shape, lambda i: (0, 0),
                                    pipeline_mode=pl.Buffered(1))
            return pl.BlockSpec(shape, lambda i: (0, 0))

        if x_buffers is not None and single_buffer_consts:
            x_spec = pl.BlockSpec((block_n, D), lambda i: (i, 0),
                                  pipeline_mode=pl.Buffered(x_buffers))
        else:
            x_spec = pl.BlockSpec((block_n, D), lambda i: (i, 0))

        return pl.pallas_call(
            kernel,
            out_shape=jax.ShapeDtypeStruct((n_pad, K_p), out_dtype),
            grid=grid,
            in_specs=[
                x_spec,                     # x: tiled over the batch
                const_spec((D, Hm_p)),      # w1: resident
                const_spec((1, Hm_p)),      # b1: resident (f32)
                const_spec((Hm_p, H_p)),    # w2: resident
                const_spec((1, H_p)),       # b2: resident (f32)
                const_spec((H_p, K_p)),     # centers^T: resident (f32)
                const_spec((1, K_p)),       # ||c||^2 + pad mask: resident (f32)
            ],
            out_specs=pl.BlockSpec((block_n, K_p), lambda i: (i, 0)),
            compiler_params=params,
        )(x_p, w1_p, b1_p, w2_p, b2_p, ct, csq)

    try:
        out = run(True)
    except Exception:
        # Fallback if this runtime rejects pl.Buffered(1) on constant-index
        # inputs; only costs extra VMEM for the resident weight buffers.
        out = run(False)
    return out[:N, :K]


def dec_reference(x, w1, b1, w2, b2, centers, alpha=1.0):
    # pure-JAX reference mirroring the PyTorch module exactly
    h = jnp.maximum(x @ w1 + b1, 0.0)
    z = h @ w2 + b2
    diff = z[:, None, :] - centers[None, :, :]
    norm_sq = jnp.sum(diff * diff, axis=2)
    numerator = 1.0 / (1.0 + norm_sq / alpha)
    numerator = numerator ** ((alpha + 1.0) / 2.0)
    return numerator / jnp.sum(numerator, axis=1, keepdims=True)


if __name__ == "__main__":
    # Small, deterministic synthetic config.
    # TODO(synk): the PyTorch DEC wraps an arbitrary user encoder; a 2-layer
    # Linear-ReLU-Linear encoder is synthesized here and fused into the kernel.
    N = 16           # batch size (block_n=8 -> 2-step grid)
    D = 32           # raw input dimension
    H_MID = 64       # encoder hidden width
    HIDDEN = 32      # hidden_dimension (embedding dim)
    K = 4            # cluster_number
    ALPHA = 1.0

    key = jax.random.PRNGKey(0)
    kx, k1, k2, k3, k4, kc = jax.random.split(key, 6)

    x = jax.random.normal(kx, (N, D), dtype=jnp.float32)
    w1 = jax.random.normal(k1, (D, H_MID), dtype=jnp.float32) * 0.1
    b1 = jax.random.normal(k2, (1, H_MID), dtype=jnp.float32) * 0.01
    w2 = jax.random.normal(k3, (H_MID, HIDDEN), dtype=jnp.float32) * 0.1
    b2 = jax.random.normal(k4, (1, HIDDEN), dtype=jnp.float32) * 0.01
    centers = jax.random.normal(kc, (K, HIDDEN), dtype=jnp.float32)

    ref = dec_reference(x, w1, b1, w2, b2, centers, alpha=ALPHA)

    # --- f32 MXU path (tight tolerance; exercises the default block_n heuristic)
    out = dec_forward(x, w1, b1, w2, b2, centers, alpha=ALPHA,
                      mxu_dtype=jnp.float32)
    out = jax.block_until_ready(out)
    assert out.shape == (N, K)
    assert jnp.allclose(out, ref, atol=1e-5, rtol=1e-5), "f32 mismatch vs reference"
    assert jnp.allclose(jnp.sum(out, axis=1), jnp.ones((N,)), atol=1e-5)

    # --- general-alpha path (exercises the fused exp/log pow) ---
    out_a = dec_forward(x, w1, b1, w2, b2, centers, alpha=2.0, block_n=8,
                        mxu_dtype=jnp.float32)
    out_a = jax.block_until_ready(out_a)
    ref_a = dec_reference(x, w1, b1, w2, b2, centers, alpha=2.0)
    assert jnp.allclose(out_a, ref_a, atol=1e-5, rtol=1e-4), "alpha=2 mismatch"

    # --- production path: bf16 MXU operands + bf16 writeback (loose tolerance)
    out_bf = dec_forward(x, w1, b1, w2, b2, centers, alpha=ALPHA, block_n=8,
                         mxu_dtype=jnp.bfloat16, out_dtype=jnp.bfloat16)
    out_bf = jax.block_until_ready(out_bf)
    assert jnp.allclose(out_bf.astype(jnp.float32), ref,
                        atol=5e-2, rtol=5e-2), "bf16 mismatch"

    print("KERNEL_OK")
</pallas_src>

<mosaic_0001>
module attributes {stable_mosaic.version = 11 : i64} {
  func.func @dec_kernel(%arg0: i32, %arg1: memref<8x32xf32, #tpu.memory_space<vmem>>, %arg2: memref<32x128xf32, #tpu.memory_space<vmem>>, %arg3: memref<1x128xf32, #tpu.memory_space<vmem>>, %arg4: memref<128x128xf32, #tpu.memory_space<vmem>>, %arg5: memref<1x128xf32, #tpu.memory_space<vmem>>, %arg6: memref<128x128xf32, #tpu.memory_space<vmem>>, %arg7: memref<1x128xf32, #tpu.memory_space<vmem>>, %arg8: memref<8x128xf32, #tpu.memory_space<vmem>>) attributes {dimension_semantics = [#tpu.dimension_semantics<parallel>], iteration_bounds = array<i64: 2>, scalar_prefetch = 0 : i64, scratch_operands = 0 : i64, tpu.core_type = #tpu.core_type<tc>, window_params = [{transform_indices = @transform_0, window_bounds = array<i64: 8, 32>}, {pipeline_mode = #tpu.pipeline_mode<synchronous>, transform_indices = @transform_1, window_bounds = array<i64: 32, 128>}, {pipeline_mode = #tpu.pipeline_mode<synchronous>, transform_indices = @transform_2, window_bounds = array<i64: 1, 128>}, {pipeline_mode = #tpu.pipeline_mode<synchronous>, transform_indices = @transform_3, window_bounds = array<i64: 128, 128>}, {pipeline_mode = #tpu.pipeline_mode<synchronous>, transform_indices = @transform_4, window_bounds = array<i64: 1, 128>}, {pipeline_mode = #tpu.pipeline_mode<synchronous>, transform_indices = @transform_5, window_bounds = array<i64: 128, 128>}, {pipeline_mode = #tpu.pipeline_mode<synchronous>, transform_indices = @transform_6, window_bounds = array<i64: 1, 128>}, {transform_indices = @transform_7, window_bounds = array<i64: 8, 128>}]} {
    %c0 = arith.constant 0 : index
    %c0_0 = arith.constant 0 : index
    %0 = vector.load %arg1[%c0, %c0_0] : memref<8x32xf32, #tpu.memory_space<vmem>>, vector<8x32xf32>
    %c0_1 = arith.constant 0 : index
    %c0_2 = arith.constant 0 : index
    %1 = vector.load %arg2[%c0_1, %c0_2] : memref<32x128xf32, #tpu.memory_space<vmem>>, vector<32x128xf32>
    %cst = arith.constant dense<0.000000e+00> : vector<8x128xf32>
    %2 = tpu.matmul %0, %1, %cst {dimension_numbers = #tpu.dot_dimension_numbers<[1], [0], [0], [1], [0, 0, 1, 1], [], []>} : vector<8x32xf32>, vector<32x128xf32>, vector<8x128xf32> -> vector<8x128xf32>
    %c0_3 = arith.constant 0 : index
    %c0_4 = arith.constant 0 : index
    %3 = vector.load %arg3[%c0_3, %c0_4] : memref<1x128xf32, #tpu.memory_space<vmem>>, vector<1x128xf32>
    %4 = vector.broadcast %3 : vector<1x128xf32> to vector<8x128xf32>
    %5 = arith.addf %2, %4 : vector<8x128xf32>
    %cst_5 = arith.constant 0.000000e+00 : f32
    %6 = vector.broadcast %cst_5 : f32 to vector<8x128xf32>
    %7 = arith.maximumf %5, %6 : vector<8x128xf32>
    %c0_6 = arith.constant 0 : index
    %c0_7 = arith.constant 0 : index
    %8 = vector.load %arg4[%c0_6, %c0_7] : memref<128x128xf32, #tpu.memory_space<vmem>>, vector<128x128xf32>
    %cst_8 = arith.constant dense<0.000000e+00> : vector<8x128xf32>
    %9 = tpu.matmul %7, %8, %cst_8 {dimension_numbers = #tpu.dot_dimension_numbers<[1], [0], [0], [1], [0, 0, 1, 1], [], []>} : vector<8x128xf32>, vector<128x128xf32>, vector<8x128xf32> -> vector<8x128xf32>
    %c0_9 = arith.constant 0 : index
    %c0_10 = arith.constant 0 : index
    %10 = vector.load %arg5[%c0_9, %c0_10] : memref<1x128xf32, #tpu.memory_space<vmem>>, vector<1x128xf32>
    %11 = vector.broadcast %10 : vector<1x128xf32> to vector<8x128xf32>
    %12 = arith.addf %9, %11 : vector<8x128xf32>
    %13 = arith.mulf %12, %12 : vector<8x128xf32>
    %cst_11 = arith.constant dense<0.000000e+00> : vector<8xf32>
    %14 = vector.multi_reduction <add>, %13, %cst_11 [1] : vector<8x128xf32> to vector<8xf32>
    %15 = vector.shape_cast %14 : vector<8xf32> to vector<8x1xf32>
    %c0_12 = arith.constant 0 : index
    %c0_13 = arith.constant 0 : index
    %16 = vector.load %arg6[%c0_12, %c0_13] : memref<128x128xf32, #tpu.memory_space<vmem>>, vector<128x128xf32>
    %cst_14 = arith.constant dense<0.000000e+00> : vector<8x128xf32>
    %17 = tpu.matmul %12, %16, %cst_14 {dimension_numbers = #tpu.dot_dimension_numbers<[1], [0], [0], [1], [0, 0, 1, 1], [], []>} : vector<8x128xf32>, vector<128x128xf32>, vector<8x128xf32> -> vector<8x128xf32>
    %c0_15 = arith.constant 0 : index
    %c0_16 = arith.constant 0 : index
    %18 = vector.load %arg7[%c0_15, %c0_16] : memref<1x128xf32, #tpu.memory_space<vmem>>, vector<1x128xf32>
    %19 = vector.broadcast %15 : vector<8x1xf32> to vector<8x128xf32>
    %20 = vector.broadcast %18 : vector<1x128xf32> to vector<8x128xf32>
    %21 = arith.addf %19, %20 : vector<8x128xf32>
    %cst_17 = arith.constant 2.000000e+00 : f32
    %22 = vector.broadcast %cst_17 : f32 to vector<8x128xf32>
    %23 = arith.mulf %22, %17 : vector<8x128xf32>
    %24 = arith.subf %21, %23 : vector<8x128xf32>
    %cst_18 = arith.constant 0.000000e+00 : f32
    %25 = vector.broadcast %cst_18 : f32 to vector<8x128xf32>
    %26 = arith.maximumf %24, %25 : vector<8x128xf32>
    %cst_19 = arith.constant 1.000000e+00 : f32
    %27 = vector.broadcast %cst_19 : f32 to vector<8x128xf32>
    %28 = arith.mulf %26, %27 : vector<8x128xf32>
    %cst_20 = arith.constant 1.000000e+00 : f32
    %29 = vector.broadcast %cst_20 : f32 to vector<8x128xf32>
    %30 = arith.addf %29, %28 : vector<8x128xf32>
    %31 = tpu.reciprocal %30 {approx = true} : vector<8x128xf32> -> vector<8x128xf32>
    %32 = arith.mulf %30, %31 : vector<8x128xf32>
    %cst_21 = arith.constant 2.000000e+00 : f32
    %33 = vector.broadcast %cst_21 : f32 to vector<8x128xf32>
    %34 = arith.subf %33, %32 : vector<8x128xf32>
    %35 = arith.mulf %31, %34 : vector<8x128xf32>
    %cst_22 = arith.constant dense<0.000000e+00> : vector<8xf32>
    %36 = vector.multi_reduction <add>, %35, %cst_22 [1] : vector<8x128xf32> to vector<8xf32>
    %37 = vector.shape_cast %36 : vector<8xf32> to vector<8x1xf32>
    %38 = tpu.reciprocal %37 {approx = true} : vector<8x1xf32> -> vector<8x1xf32>
    %39 = arith.mulf %37, %38 : vector<8x1xf32>
    %cst_23 = arith.constant 2.000000e+00 : f32
    %40 = vector.broadcast %cst_23 : f32 to vector<8x1xf32>
    %41 = arith.subf %40, %39 : vector<8x1xf32>
    %42 = arith.mulf %38, %41 : vector<8x1xf32>
    %43 = vector.broadcast %42 : vector<8x1xf32> to vector<8x128xf32>
    %44 = arith.mulf %35, %43 : vector<8x128xf32>
    %c0_24 = arith.constant 0 : index
    %c0_25 = arith.constant 0 : index
    %45 = vector.load %arg8[%c0_24, %c0_25] : memref<8x128xf32, #tpu.memory_space<vmem>>, vector<8x128xf32>
    tpu.vector_store %arg8[%c0_24, %c0_25], %44 {strides = array<i32>} : memref<8x128xf32, #tpu.memory_space<vmem>>, vector<8x128xf32>,
    return
  }
  func.func @transform_0(%arg0: i32) -> (i32, i32) {
    %c0_i32 = arith.constant 0 : i32
    %c0_i32_0 = arith.constant 0 : i32
    return %arg0, %c0_i32 : i32, i32
  }
  func.func @transform_1(%arg0: i32) -> (i32, i32) {
    %c0_i32 = arith.constant 0 : i32
    %c0_i32_0 = arith.constant 0 : i32
    %c0_i32_1 = arith.constant 0 : i32
    return %c0_i32, %c0_i32_0 : i32, i32
  }
  func.func @transform_2(%arg0: i32) -> (i32, i32) {
    %c0_i32 = arith.constant 0 : i32
    %c0_i32_0 = arith.constant 0 : i32
    %c0_i32_1 = arith.constant 0 : i32
    return %c0_i32, %c0_i32_0 : i32, i32
  }
  func.func @transform_3(%arg0: i32) -> (i32, i32) {
    %c0_i32 = arith.constant 0 : i32
    %c0_i32_0 = arith.constant 0 : i32
    %c0_i32_1 = arith.constant 0 : i32
    return %c0_i32, %c0_i32_0 : i32, i32
  }
  func.func @transform_4(%arg0: i32) -> (i32, i32) {
    %c0_i32 = arith.constant 0 : i32
    %c0_i32_0 = arith.constant 0 : i32
    %c0_i32_1 = arith.constant 0 : i32
    return %c0_i32, %c0_i32_0 : i32, i32
  }
  func.func @transform_5(%arg0: i32) -> (i32, i32) {
    %c0_i32 = arith.constant 0 : i32
    %c0_i32_0 = arith.constant 0 : i32
    %c0_i32_1 = arith.constant 0 : i32
    return %c0_i32, %c0_i32_0 : i32, i32
  }
  func.func @transform_6(%arg0: i32) -> (i32, i32) {
    %c0_i32 = arith.constant 0 : i32
    %c0_i32_0 = arith.constant 0 : i32
    %c0_i32_1 = arith.constant 0 : i32
    return %c0_i32, %c0_i32_0 : i32, i32
  }
  func.func @transform_7(%arg0: i32) -> (i32, i32) {
    %c0_i32 = arith.constant 0 : i32
    %c0_i32_0 = arith.constant 0 : i32
    return %arg0, %c0_i32 : i32, i32
  }
}

module attributes {stable_mosaic.version = 11 : i64} {
  func.func @dec_kernel(%arg0: i32, %arg1: memref<8x32xf32, #tpu.memory_space<vmem>>, %arg2: memref<32x128xf32, #tpu.memory_space<vmem>>, %arg3: memref<1x128xf32, #tpu.memory_space<vmem>>, %arg4: memref<128x128xf32, #tpu.memory_space<vmem>>, %arg5: memref<1x128xf32, #tpu.memory_space<vmem>>, %arg6: memref<128x128xf32, #tpu.memory_space<vmem>>, %arg7: memref<1x128xf32, #tpu.memory_space<vmem>>, %arg8: memref<8x128xf32, #tpu.memory_space<vmem>>) attributes {dimension_semantics = [#tpu.dimension_semantics<parallel>], iteration_bounds = array<i64: 2>, scalar_prefetch = 0 : i64, scratch_operands = 0 : i64, tpu.core_type = #tpu.core_type<tc>, window_params = [{transform_indices = @transform_0, window_bounds = array<i64: 8, 32>}, {pipeline_mode = #tpu.pipeline_mode<synchronous>, transform_indices = @transform_1, window_bounds = array<i64: 32, 128>}, {pipeline_mode = #tpu.pipeline_mode<synchronous>, transform_indices = @transform_2, window_bounds = array<i64: 1, 128>}, {pipeline_mode = #tpu.pipeline_mode<synchronous>, transform_indices = @transform_3, window_bounds = array<i64: 128, 128>}, {pipeline_mode = #tpu.pipeline_mode<synchronous>, transform_indices = @transform_4, window_bounds = array<i64: 1, 128>}, {pipeline_mode = #tpu.pipeline_mode<synchronous>, transform_indices = @transform_5, window_bounds = array<i64: 128, 128>}, {pipeline_mode = #tpu.pipeline_mode<synchronous>, transform_indices = @transform_6, window_bounds = array<i64: 1, 128>}, {transform_indices = @transform_7, window_bounds = array<i64: 8, 128>}]} {
    %c0 = arith.constant 0 : index
    %c0_0 = arith.constant 0 : index
    %0 = vector.load %arg1[%c0, %c0_0] : memref<8x32xf32, #tpu.memory_space<vmem>>, vector<8x32xf32>
    %c0_1 = arith.constant 0 : index
    %c0_2 = arith.constant 0 : index
    %1 = vector.load %arg2[%c0_1, %c0_2] : memref<32x128xf32, #tpu.memory_space<vmem>>, vector<32x128xf32>
    %cst = arith.constant dense<0.000000e+00> : vector<8x128xf32>
    %2 = tpu.matmul %0, %1, %cst {dimension_numbers = #tpu.dot_dimension_numbers<[1], [0], [0], [1], [0, 0, 1, 1], [], []>} : vector<8x32xf32>, vector<32x128xf32>, vector<8x128xf32> -> vector<8x128xf32>
    %c0_3 = arith.constant 0 : index
    %c0_4 = arith.constant 0 : index
    %3 = vector.load %arg3[%c0_3, %c0_4] : memref<1x128xf32, #tpu.memory_space<vmem>>, vector<1x128xf32>
    %4 = vector.broadcast %3 : vector<1x128xf32> to vector<8x128xf32>
    %5 = arith.addf %2, %4 : vector<8x128xf32>
    %cst_5 = arith.constant 0.000000e+00 : f32
    %6 = vector.broadcast %cst_5 : f32 to vector<8x128xf32>
    %7 = arith.maximumf %5, %6 : vector<8x128xf32>
    %c0_6 = arith.constant 0 : index
    %c0_7 = arith.constant 0 : index
    %8 = vector.load %arg4[%c0_6, %c0_7] : memref<128x128xf32, #tpu.memory_space<vmem>>, vector<128x128xf32>
    %cst_8 = arith.constant dense<0.000000e+00> : vector<8x128xf32>
    %9 = tpu.matmul %7, %8, %cst_8 {dimension_numbers = #tpu.dot_dimension_numbers<[1], [0], [0], [1], [0, 0, 1, 1], [], []>} : vector<8x128xf32>, vector<128x128xf32>, vector<8x128xf32> -> vector<8x128xf32>
    %c0_9 = arith.constant 0 : index
    %c0_10 = arith.constant 0 : index
    %10 = vector.load %arg5[%c0_9, %c0_10] : memref<1x128xf32, #tpu.memory_space<vmem>>, vector<1x128xf32>
    %11 = vector.broadcast %10 : vector<1x128xf32> to vector<8x128xf32>
    %12 = arith.addf %9, %11 : vector<8x128xf32>
    %13 = arith.mulf %12, %12 : vector<8x128xf32>
    %cst_11 = arith.constant dense<0.000000e+00> : vector<8xf32>
    %14 = vector.multi_reduction <add>, %13, %cst_11 [1] : vector<8x128xf32> to vector<8xf32>
    %15 = vector.shape_cast %14 : vector<8xf32> to vector<8x1xf32>
    %c0_12 = arith.constant 0 : index
    %c0_13 = arith.constant 0 : index
    %16 = vector.load %arg6[%c0_12, %c0_13] : memref<128x128xf32, #tpu.memory_space<vmem>>, vector<128x128xf32>
    %cst_14 = arith.constant dense<0.000000e+00> : vector<8x128xf32>
    %17 = tpu.matmul %12, %16, %cst_14 {dimension_numbers = #tpu.dot_dimension_numbers<[1], [0], [0], [1], [0, 0, 1, 1], [], []>} : vector<8x128xf32>, vector<128x128xf32>, vector<8x128xf32> -> vector<8x128xf32>
    %c0_15 = arith.constant 0 : index
    %c0_16 = arith.constant 0 : index
    %18 = vector.load %arg7[%c0_15, %c0_16] : memref<1x128xf32, #tpu.memory_space<vmem>>, vector<1x128xf32>
    %19 = vector.broadcast %15 : vector<8x1xf32> to vector<8x128xf32>
    %20 = vector.broadcast %18 : vector<1x128xf32> to vector<8x128xf32>
    %21 = arith.addf %19, %20 : vector<8x128xf32>
    %cst_17 = arith.constant 2.000000e+00 : f32
    %22 = vector.broadcast %cst_17 : f32 to vector<8x128xf32>
    %23 = arith.mulf %22, %17 : vector<8x128xf32>
    %24 = arith.subf %21, %23 : vector<8x128xf32>
    %cst_18 = arith.constant 0.000000e+00 : f32
    %25 = vector.broadcast %cst_18 : f32 to vector<8x128xf32>
    %26 = arith.maximumf %24, %25 : vector<8x128xf32>
    %cst_19 = arith.constant 1.000000e+00 : f32
    %27 = vector.broadcast %cst_19 : f32 to vector<8x128xf32>
    %28 = arith.mulf %26, %27 : vector<8x128xf32>
    %cst_20 = arith.constant 1.000000e+00 : f32
    %29 = vector.broadcast %cst_20 : f32 to vector<8x128xf32>
    %30 = arith.addf %29, %28 : vector<8x128xf32>
    %31 = tpu.reciprocal %30 {approx = true} : vector<8x128xf32> -> vector<8x128xf32>
    %32 = arith.mulf %30, %31 : vector<8x128xf32>
    %cst_21 = arith.constant 2.000000e+00 : f32
    %33 = vector.broadcast %cst_21 : f32 to vector<8x128xf32>
    %34 = arith.subf %33, %32 : vector<8x128xf32>
    %35 = arith.mulf %31, %34 : vector<8x128xf32>
    %cst_22 = arith.constant dense<0.000000e+00> : vector<8xf32>
    %36 = vector.multi_reduction <add>, %35, %cst_22 [1] : vector<8x128xf32> to vector<8xf32>
    %37 = vector.shape_cast %36 : vector<8xf32> to vector<8x1xf32>
    %38 = tpu.reciprocal %37 {approx = true} : vector<8x1xf32> -> vector<8x1xf32>
    %39 = arith.mulf %37, %38 : vector<8x1xf32>
    %cst_23 = arith.constant 2.000000e+00 : f32
    %40 = vector.broadcast %cst_23 : f32 to vector<8x1xf32>
    %41 = arith.subf %40, %39 : vector<8x1xf32>
    %42 = arith.mulf %38, %41 : vector<8x1xf32>
    %43 = vector.broadcast %42 : vector<8x1xf32> to vector<8x128xf32>
    %44 = arith.mulf %35, %43 : vector<8x128xf32>
    %c0_24 = arith.constant 0 : index
    %c0_25 = arith.constant 0 : index
    %45 = vector.load %arg8[%c0_24, %c0_25] : memref<8x128xf32, #tpu.memory_space<vmem>>, vector<8x128xf32>
    tpu.vector_store %arg8[%c0_24, %c0_25], %44 {strides = array<i32>} : memref<8x128xf32, #tpu.memory_space<vmem>>, vector<8x128xf32>,
    return
  }
  func.func @transform_0(%arg0: i32) -> (i32, i32) {
    %c0_i32 = arith.constant 0 : i32
    %c0_i32_0 = arith.constant 0 : i32
    return %arg0, %c0_i32 : i32, i32
  }
  func.func @transform_1(%arg0: i32) -> (i32, i32) {
    %c0_i32 = arith.constant 0 : i32
    %c0_i32_0 = arith.constant 0 : i32
    %c0_i32_1 = arith.constant 0 : i32
    return %c0_i32, %c0_i32_0 : i32, i32
  }
  func.func @transform_2(%arg0: i32) -> (i32, i32) {
    %c0_i32 = arith.constant 0 : i32
    %c0_i32_0 = arith.constant 0 : i32
    %c0_i32_1 = arith.constant 0 : i32
    return %c0_i32, %c0_i32_0 : i32, i32
  }
  func.func @transform_3(%arg0: i32) -> (i32, i32) {
    %c0_i32 = arith.constant 0 : i32
    %c0_i32_0 = arith.constant 0 : i32
    %c0_i32_1 = arith.constant 0 : i32
    return %c0_i32, %c0_i32_0 : i32, i32
  }
  func.func @transform_4(%arg0: i32) -> (i32, i32) {
    %c0_i32 = arith.constant 0 : i32
    %c0_i32_0 = arith.constant 0 : i32
    %c0_i32_1 = arith.constant 0 : i32
    return %c0_i32, %c0_i32_0 : i32, i32
  }
  func.func @transform_5(%arg0: i32) -> (i32, i32) {
    %c0_i32 = arith.constant 0 : i32
    %c0_i32_0 = arith.constant 0 : i32
    %c0_i32_1 = arith.constant 0 : i32
    return %c0_i32, %c0_i32_0 : i32, i32
  }
  func.func @transform_6(%arg0: i32) -> (i32, i32) {
    %c0_i32 = arith.constant 0 : i32
    %c0_i32_0 = arith.constant 0 : i32
    %c0_i32_1 = arith.constant 0 : i32
    return %c0_i32, %c0_i32_0 : i32, i32
  }
  func.func @transform_7(%arg0: i32) -> (i32, i32) {
    %c0_i32 = arith.constant 0 : i32
    %c0_i32_0 = arith.constant 0 : i32
    return %arg0, %c0_i32 : i32, i32
  }
}

</mosaic_0001>

<llo_original>
// kernel: tpu_custom_call.1
$region0: #{tpu_custom_call.1}
  #allocation0 [shape = 'u32[]', space=smem, size = 0x4, offset = 0x4, fixed_abs, tag = 'smem constant byte address 0x4 - core index']
  #allocation1 [shape = 'u32[72,128]{1,0:T(1,128)}', space=vmem, size = 0x9000, scoped, tag = 'internal scratch']
  %s0 = inlined_call_operand.hbm [shape: f32[16,32], index: 0, kind: input, shape index: {}]
  %s1 = inlined_call_operand.hbm [shape: f32[32,128], index: 1, kind: input, shape index: {}]
  %s2 = inlined_call_operand.vmem [shape: f32[1,128], index: 2, kind: input, shape index: {}]
  %s3 = inlined_call_operand.hbm [shape: f32[128,128], index: 3, kind: input, shape index: {}]
  %s4 = inlined_call_operand.vmem [shape: f32[1,128], index: 4, kind: input, shape index: {}]
  %s5 = inlined_call_operand.hbm [shape: f32[128,128], index: 5, kind: input, shape index: {}]
  %s6 = inlined_call_operand.vmem [shape: f32[1,128], index: 6, kind: input, shape index: {}]
  %s7 = inlined_call_operand.hbm [shape: f32[16,128], index: 7, kind: output, shape index: {}]
  %s8 = sld [smem:[#allocation0]]
  $region77: #{tpu_custom_call.1} parent=0
    _
  %s10 = ssub.s32 1, %s8
  %s11 = scalar_select 0, %s10, %s8
  $region1: #{tpu_custom_call.1} parent=0
    #allocation2 [shape = 'u8[8192]{0}', space=vmem, size = 0x2000, scoped, tag = 'input window, operand 0']
    #allocation3 [shape = 's32[2]{0}', space=sflag, size = 0x8, scoped, tag = 'scoped memory for tpu_custom_call.1']
    #allocation4 [shape = 's32[2]{0}', space=sflag, size = 0x8, scoped, tag = 'scoped memory for tpu_custom_call.1']
    #allocation5 [shape = 'u8[16384]{0}', space=vmem, size = 0x4000, scoped, tag = 'input window, operand 1, single buffered']
    #allocation6 [shape = 's32[1]{0}', space=sflag, size = 0x4, scoped, tag = 'scoped memory for tpu_custom_call.1']
    #allocation7 [shape = 'u8[65536]{0}', space=vmem, size = 0x10000, scoped, tag = 'input window, operand 3, single buffered']
    #allocation8 [shape = 'u8[65536]{0}', space=vmem, size = 0x10000, scoped, tag = 'input window, operand 5, single buffered']
    #allocation9 [shape = 's32[1]{0}', space=sflag, size = 0x4, scoped, tag = 'scoped memory for tpu_custom_call.1']
    #allocation10 [shape = 'u8[8192]{0}', space=vmem, size = 0x2000, scoped, tag = 'output window, operand 0']
    %12 = vsyncpa [#allocation3], 0
    %s13 = scalar_lea.sflag [#allocation3], 1
    %14 = vsyncpa %s13, 0
    %15 = vsyncpa [#allocation6], 0
    %16 = vsyncpa [#allocation9], 0
    %17 = vsyncpa [#allocation4], 0
    %s18 = scalar_lea.sflag [#allocation4], 1
    %19 = vsyncpa %s18, 0
    loop: start=0, step=1, limit=4
    $region2: #{tpu_custom_call.1} parent=1 // loop_pre_header
      _
    $region3: #{tpu_custom_call.1} parent=1 // loop_header
      %s21 = sphi 0, %s25
      %p22 = scmp.ge.s32.totalorder %s21, 4
      %s31 = sphi 0, %s33
      %s34 = sphi 0, %s31
      %s35 = sphi 0, %s34
      %s51 = sphi 0, %s35
      %s55 = sphi 0, %s55
      %s57 = sphi 0, %s55
      %s58 = sphi 0, %s57
      %s72 = sphi 0, %s58
      %s76 = sphi 0, %s76
      %s78 = sphi 0, %s76
      %s79 = sphi 0, %s78
      %s93 = sphi 0, %s79
      %s97 = sphi 0, %s97
      %s99 = sphi 0, %s97
      %s100 = sphi 0, %s99
      %s114 = sphi 0, %s100
      %s118 = sphi 0, %s118
      %s120 = sphi 0, %s118
      %s121 = sphi 0, %s120
      %s135 = sphi 0, %s121
      %s139 = sphi 0, %s139
      %s141 = sphi 0, %s139
      %s142 = sphi 0, %s141
      %s156 = sphi 0, %s142
      %s160 = sphi 0, %s160
      %s162 = sphi 0, %s160
      %s163 = sphi 0, %s162
      %s177 = sphi 0, %s163
      %s183 = sphi 0, %s185
      %s186 = sphi 0, %s183
      %s187 = sphi 0, %s186
      %s203 = sphi 0, %s187
    $region4: #{tpu_custom_call.1} parent=1 // loop_header_branch
      %24 = sbr.rel (%p22) target = $region8
    $region5: #{tpu_custom_call.1} parent=1 // loop_body
      %s26 = ssub.s32 %s21, 1
      %s27 = ssub.s32 %s21, 2
      %s28 = sadd.s32 %s21, 1
      %s29 = ssub.s32 %s21, %s28
      %p30 = scmp.eq.s32.totalorder %s29, 0
      %s32 = sadd.s32 %s31, 1
      %s33 = scalar_select %p30, %s31, %s32
      %p36 = pneg %p30
      %p37 = scmp.eq.s32.totalorder %s21, 1
      %p38 = por %p36, %p37
      %p39 = scmp.ne.s32.totalorder %s31, %s34
      %p40 = scmp.eq.s32.totalorder %s21, 0
      %p41 = por %p39, %p40
      %p42 = scmp.ne.s32.totalorder %s31, %s34
      %p43 = scmp.eq.s32.totalorder %s26, 1
      %p44 = por %p42, %p43
      %p45 = scmp.ne.s32.totalorder %s34, %s35
      %p46 = scmp.eq.s32.totalorder %s26, 0
      %p47 = por %p45, %p46
      %p48 = scmp.ne.s32.totalorder %s34, %s35
      %p49 = scmp.eq.s32.totalorder %s27, 1
      %p50 = por %p48, %p49
      %p52 = scmp.ne.s32.totalorder %s35, %s51
      %p53 = scmp.eq.s32.totalorder %s27, 0
      %p54 = por %p52, %p53
      %s56 = sadd.s32 %s55, 1
      %p59 = scmp.eq.s32.totalorder %s21, 1
      %p60 = scmp.ne.s32.totalorder %s55, %s57
      %p61 = scmp.eq.s32.totalorder %s21, 0
      %p62 = por %p60, %p61
      %p63 = scmp.ne.s32.totalorder %s55, %s57
      %p64 = scmp.eq.s32.totalorder %s26, 1
      %p65 = por %p63, %p64
      %p66 = scmp.ne.s32.totalorder %s57, %s58
      %p67 = scmp.eq.s32.totalorder %s26, 0
      %p68 = por %p66, %p67
      %p69 = scmp.ne.s32.totalorder %s57, %s58
      %p70 = scmp.eq.s32.totalorder %s27, 1
      %p71 = por %p69, %p70
      %p73 = scmp.ne.s32.totalorder %s58, %s72
      %p74 = scmp.eq.s32.totalorder %s27, 0
      %p75 = por %p73, %p74
      %s77 = sadd.s32 %s76, 1
      %p80 = scmp.eq.s32.totalorder %s21, 1
      %p81 = scmp.ne.s32.totalorder %s76, %s78
      %p82 = scmp.eq.s32.totalorder %s21, 0
      %p83 = por %p81, %p82
      %p84 = scmp.ne.s32.totalorder %s76, %s78
      %p85 = scmp.eq.s32.totalorder %s26, 1
      %p86 = por %p84, %p85
      %p87 = scmp.ne.s32.totalorder %s78, %s79
      %p88 = scmp.eq.s32.totalorder %s26, 0
      %p89 = por %p87, %p88
      %p90 = scmp.ne.s32.totalorder %s78, %s79
      %p91 = scmp.eq.s32.totalorder %s27, 1
      %p92 = por %p90, %p91
      %p94 = scmp.ne.s32.totalorder %s79, %s93
      %p95 = scmp.eq.s32.totalorder %s27, 0
      %p96 = por %p94, %p95
      %s98 = sadd.s32 %s97, 1
      %p101 = scmp.eq.s32.totalorder %s21, 1
      %p102 = scmp.ne.s32.totalorder %s97, %s99
      %p103 = scmp.eq.s32.totalorder %s21, 0
      %p104 = por %p102, %p103
      %p105 = scmp.ne.s32.totalorder %s97, %s99
      %p106 = scmp.eq.s32.totalorder %s26, 1
      %p107 = por %p105, %p106
      %p108 = scmp.ne.s32.totalorder %s99, %s100
      %p109 = scmp.eq.s32.totalorder %s26, 0
      %p110 = por %p108, %p109
      %p111 = scmp.ne.s32.totalorder %s99, %s100
      %p112 = scmp.eq.s32.totalorder %s27, 1
      %p113 = por %p111, %p112
      %p115 = scmp.ne.s32.totalorder %s100, %s114
      %p116 = scmp.eq.s32.totalorder %s27, 0
      %p117 = por %p115, %p116
      %s119 = sadd.s32 %s118, 1
      %p122 = scmp.eq.s32.totalorder %s21, 1
      %p123 = scmp.ne.s32.totalorder %s118, %s120
      %p124 = scmp.eq.s32.totalorder %s21, 0
      %p125 = por %p123, %p124
      %p126 = scmp.ne.s32.totalorder %s118, %s120
      %p127 = scmp.eq.s32.totalorder %s26, 1
      %p128 = por %p126, %p127
      %p129 = scmp.ne.s32.totalorder %s120, %s121
      %p130 = scmp.eq.s32.totalorder %s26, 0
      %p131 = por %p129, %p130
      %p132 = scmp.ne.s32.totalorder %s120, %s121
      %p133 = scmp.eq.s32.totalorder %s27, 1
      %p134 = por %p132, %p133
      %p136 = scmp.ne.s32.totalorder %s121, %s135
      %p137 = scmp.eq.s32.totalorder %s27, 0
      %p138 = por %p136, %p137
      %s140 = sadd.s32 %s139, 1
      %p143 = scmp.eq.s32.totalorder %s21, 1
      %p144 = scmp.ne.s32.totalorder %s139, %s141
      %p145 = scmp.eq.s32.totalorder %s21, 0
      %p146 = por %p144, %p145
      %p147 = scmp.ne.s32.totalorder %s139, %s141
      %p148 = scmp.eq.s32.totalorder %s26, 1
      %p149 = por %p147, %p148
      %p150 = scmp.ne.s32.totalorder %s141, %s142
      %p151 = scmp.eq.s32.totalorder %s26, 0
      %p152 = por %p150, %p151
      %p153 = scmp.ne.s32.totalorder %s141, %s142
      %p154 = scmp.eq.s32.totalorder %s27, 1
      %p155 = por %p153, %p154
      %p157 = scmp.ne.s32.totalorder %s142, %s156
      %p158 = scmp.eq.s32.totalorder %s27, 0
      %p159 = por %p157, %p158
      %s161 = sadd.s32 %s160, 1
      %p164 = scmp.eq.s32.totalorder %s21, 1
      %p165 = scmp.ne.s32.totalorder %s160, %s162
      %p166 = scmp.eq.s32.totalorder %s21, 0
      %p167 = por %p165, %p166
      %p168 = scmp.ne.s32.totalorder %s160, %s162
      %p169 = scmp.eq.s32.totalorder %s26, 1
      %p170 = por %p168, %p169
      %p171 = scmp.ne.s32.totalorder %s162, %s163
      %p172 = scmp.eq.s32.totalorder %s26, 0
      %p173 = por %p171, %p172
      %p174 = scmp.ne.s32.totalorder %s162, %s163
      %p175 = scmp.eq.s32.totalorder %s27, 1
      %p176 = por %p174, %p175
      %p178 = scmp.ne.s32.totalorder %s163, %s177
      %p179 = scmp.eq.s32.totalorder %s27, 0
      %p180 = por %p178, %p179
      %s181 = ssub.s32 %s21, %s28
      %p182 = scmp.eq.s32.totalorder %s181, 0
      %s184 = sadd.s32 %s183, 1
      %s185 = scalar_select %p182, %s183, %s184
      %p188 = pneg %p182
      %p189 = scmp.eq.s32.totalorder %s21, 1
      %p190 = por %p188, %p189
      %p191 = scmp.ne.s32.totalorder %s183, %s186
      %p192 = scmp.eq.s32.totalorder %s21, 0
      %p193 = por %p191, %p192
      %p194 = scmp.ne.s32.totalorder %s183, %s186
      %p195 = scmp.eq.s32.totalorder %s26, 1
      %p196 = por %p194, %p195
      %p197 = scmp.ne.s32.totalorder %s186, %s187
      %p198 = scmp.eq.s32.totalorder %s26, 0
      %p199 = por %p197, %p198
      %p200 = scmp.ne.s32.totalorder %s186, %s187
      %p201 = scmp.eq.s32.totalorder %s27, 1
      %p202 = por %p200, %p201
      %p204 = scmp.ne.s32.totalorder %s187, %s203
      %p205 = scmp.eq.s32.totalorder %s27, 0
      %p206 = por %p204, %p205
      %p207 = scmp.le.s32.totalorder 1, %s21
      %p208 = scmp.lt.s32.totalorder %s21, 3
      %p209 = pnand %p207, %p208
      %p210 = pneg %p209
      // Predicated region
      $region9: #{tpu_custom_call.1} parent=5 // pred_check
        _
      $region10: #{tpu_custom_call.1} parent=5 // pred_check_branch
        %212 = sbr.rel (%p209) target = $region12
      $region11: #{tpu_custom_call.1} parent=5 // pred_region
        %s213 = ssub.s32 %s21, 1
        // Predicated region
        $region13: #{tpu_custom_call.1} parent=11 // pred_check
          %p214 = pneg %p68
        $region14: #{tpu_custom_call.1} parent=11 // pred_check_branch
          %216 = sbr.rel (%p214) target = $region16
        $region15: #{tpu_custom_call.1} parent=11 // pred_region
          %218 = vsyncadd [#allocation6], 0
          %s219 = sshll.u32 %s1, 4
          %s220 = int_to_ptr.hbm [resolvable:$true] %s219
          %s221 = sshll.u32 [#allocation5], 4
          %s222 = int_to_ptr.vmem [resolvable:$true] %s221
          %227 = dma.hbm_to_vmem [thread:$0]  %s220, 512, %s222, [#allocation6], 128, 128, 8
        $region16: #{tpu_custom_call.1} parent=11 // pred_fallthru
          _
        // Predicated region
        $region17: #{tpu_custom_call.1} parent=11 // pred_check
          %p228 = pneg %p89
        $region18: #{tpu_custom_call.1} parent=11 // pred_check_branch
          %230 = sbr.rel (%p228) target = $region20
        $region19: #{tpu_custom_call.1} parent=11 // pred_region
          _
        $region20: #{tpu_custom_call.1} parent=11 // pred_fallthru
          _
        // Predicated region
        $region21: #{tpu_custom_call.1} parent=11 // pred_check
          %p231 = pneg %p110
        $region22: #{tpu_custom_call.1} parent=11 // pred_check_branch
          %233 = sbr.rel (%p231) target = $region24
        $region23: #{tpu_custom_call.1} parent=11 // pred_region
          %235 = vsyncadd [#allocation6], 0
          %s236 = sshll.u32 %s3, 4
          %s237 = int_to_ptr.hbm [resolvable:$true] %s236
          %s238 = sshll.u32 [#allocation7], 4
          %s239 = int_to_ptr.vmem [resolvable:$true] %s238
          %244 = dma.hbm_to_vmem [thread:$0]  %s237, 2048, %s239, [#allocation6], 128, 128, 8
        $region24: #{tpu_custom_call.1} parent=11 // pred_fallthru
          _
        // Predicated region
        $region25: #{tpu_custom_call.1} parent=11 // pred_check
          %p245 = pneg %p131
        $region26: #{tpu_custom_call.1} parent=11 // pred_check_branch
          %247 = sbr.rel (%p245) target = $region28
        $region27: #{tpu_custom_call.1} parent=11 // pred_region
          _
        $region28: #{tpu_custom_call.1} parent=11 // pred_fallthru
          _
        // Predicated region
        $region29: #{tpu_custom_call.1} parent=11 // pred_check
          %p248 = pneg %p152
        $region30: #{tpu_custom_call.1} parent=11 // pred_check_branch
          %250 = sbr.rel (%p248) target = $region32
        $region31: #{tpu_custom_call.1} parent=11 // pred_region
          %252 = vsyncadd [#allocation9], 0
          %s253 = sshll.u32 %s5, 4
          %s254 = int_to_ptr.hbm [resolvable:$true] %s253
          %s255 = sshll.u32 [#allocation8], 4
          %s256 = int_to_ptr.vmem [resolvable:$true] %s255
          %261 = dma.hbm_to_vmem [thread:$0]  %s254, 2048, %s256, [#allocation9], 128, 128, 8
        $region32: #{tpu_custom_call.1} parent=11 // pred_fallthru
          _
        // Predicated region
        $region33: #{tpu_custom_call.1} parent=11 // pred_check
          %p262 = pneg %p173
        $region34: #{tpu_custom_call.1} parent=11 // pred_check_branch
          %264 = sbr.rel (%p262) target = $region36
        $region35: #{tpu_custom_call.1} parent=11 // pred_region
          _
        $region36: #{tpu_custom_call.1} parent=11 // pred_fallthru
          _
      $region12: #{tpu_custom_call.1} parent=5 // pred_fallthru
        _
      %p265 = scmp.lt.s32.totalorder %s21, 2
      // Predicated region
      $region37: #{tpu_custom_call.1} parent=5 // pred_check
        %p266 = pneg %p265
      $region38: #{tpu_custom_call.1} parent=5 // pred_check_branch
        %268 = sbr.rel (%p266) target = $region40
      $region39: #{tpu_custom_call.1} parent=5 // pred_region
        // Predicated region
        $region41: #{tpu_custom_call.1} parent=39 // pred_check
          %p269 = pneg %p41
        $region42: #{tpu_custom_call.1} parent=39 // pred_check_branch
          %271 = sbr.rel (%p269) target = $region44
        $region43: #{tpu_custom_call.1} parent=39 // pred_region
          %s272 = sand.u32 %s31, 1
          %s273 = scalar_lea.sflag [#allocation3], %s272
          %s274 = sand.u32 %s31, 1
          %s275 = smul.addr %s274, 8
          %s276 = scalar_lea.vmem [#allocation2], %s275
          %278 = vsyncadd %s273, 0
          %s279 = smul.addr %s21, 8
          %s280 = scalar_lea.hbm %s0, %s279
          %s282 = sshll.u32 %s280, 4
          %s283 = int_to_ptr.hbm [resolvable:$true] %s282
          %s284 = sshll.u32 %s276, 4
          %s285 = int_to_ptr.vmem [resolvable:$true] %s284
          %287 = dma.hbm_to_vmem [thread:$0]  %s283, 128, %s285, %s273
        $region44: #{tpu_custom_call.1} parent=39 // pred_fallthru
          _
      $region40: #{tpu_custom_call.1} parent=5 // pred_fallthru
        _
      %p288 = scmp.le.s32.totalorder 1, %s21
      %p289 = scmp.lt.s32.totalorder %s21, 3
      %p290 = pnand %p288, %p289
      %p291 = pneg %p290
      // Predicated region
      $region45: #{tpu_custom_call.1} parent=5 // pred_check
        _
      $region46: #{tpu_custom_call.1} parent=5 // pred_check_branch
        %293 = sbr.rel (%p290) target = $region48
      $region47: #{tpu_custom_call.1} parent=5 // pred_region
        %s294 = ssub.s32 %s21, 1
        %s295 = sand.u32 %s34, 1
        %s296 = scalar_lea.sflag [#allocation3], %s295
        %s297 = sand.u32 %s34, 1
        %s298 = smul.addr %s297, 8
        %s299 = scalar_lea.vmem [#allocation2], %s298
        // Predicated region
        $region49: #{tpu_custom_call.1} parent=47 // pred_check
          %p300 = pneg %p47
        $region50: #{tpu_custom_call.1} parent=47 // pred_check_branch
          %302 = sbr.rel (%p300) target = $region52
        $region51: #{tpu_custom_call.1} parent=47 // pred_region
          %304 = dma.done %s296, 128
        $region52: #{tpu_custom_call.1} parent=47 // pred_fallthru
          _
        // Predicated region
        $region53: #{tpu_custom_call.1} parent=47 // pred_check
          %p305 = pneg %p68
        $region54: #{tpu_custom_call.1} parent=47 // pred_check_branch
          %307 = sbr.rel (%p305) target = $region56
        $region55: #{tpu_custom_call.1} parent=47 // pred_region
          %309 = dma.done [#allocation6], 512
        $region56: #{tpu_custom_call.1} parent=47 // pred_fallthru
          _
        // Predicated region
        $region57: #{tpu_custom_call.1} parent=47 // pred_check
          %p310 = pneg %p110
        $region58: #{tpu_custom_call.1} parent=47 // pred_check_branch
          %312 = sbr.rel (%p310) target = $region60
        $region59: #{tpu_custom_call.1} parent=47 // pred_region
          %314 = dma.done [#allocation6], 2048
        $region60: #{tpu_custom_call.1} parent=47 // pred_fallthru
          _
        // Predicated region
        $region61: #{tpu_custom_call.1} parent=47 // pred_check
          %p315 = pneg %p152
        $region62: #{tpu_custom_call.1} parent=47 // pred_check_branch
          %317 = sbr.rel (%p315) target = $region64
        $region63: #{tpu_custom_call.1} parent=47 // pred_region
          %319 = dma.done [#allocation9], 2048
        $region64: #{tpu_custom_call.1} parent=47 // pred_fallthru
          _
        %s320 = sand.u32 %s34, 1
        %s321 = scalar_lea.sflag [#allocation3], %s320
        %s322 = sand.u32 %s34, 1
        %s323 = smul.addr %s322, 8
        %s324 = scalar_lea.vmem [#allocation2], %s323
        %p325 = pneg %p47
        %p326 = pneg %p44
        %p327 = pneg %p68
        %p328 = pneg %p65
        %p329 = pneg %p89
        %p330 = pneg %p86
        %p331 = pneg %p110
        %p332 = pneg %p107
        %p333 = pneg %p131
        %p334 = pneg %p128
        %p335 = pneg %p152
        %p336 = pneg %p149
        %p337 = pneg %p173
        %p338 = pneg %p170
        %p339 = pneg %p199
        %p340 = pneg %p196
        %s341 = sand.u32 %s186, 1
        %s342 = scalar_lea.sflag [#allocation4], %s341
        %s343 = sand.u32 %s186, 1
        %s344 = smul.addr %s343, 8
        %s345 = scalar_lea.vmem [#allocation10], %s344
        %v346 = vld [vmem:[%s299] sm:$0xff]
        %v347 = vld [vmem:[#allocation5] sm:$0xff]
        %v348 = vld [vmem:[#allocation5 + $0x8] sm:$0xff]
        %v349 = vld [vmem:[#allocation5 + $0x10] sm:$0xff]
        %v350 = vld [vmem:[#allocation5 + $0x18] sm:$0xff]
        %v351 = vld [vmem:[%s2] sm:$0x1]
        %v353 = vperm.slane %v351, 0
        %vm355 = vcmask 261120
        %v357 = vsel %vm355, %v346, 0
        %359 = vmatpush.msra.mxu0 0.0
        %360 = vmatpush.msra.mxu0 0.0
        %361 = vmatpush.msra.mxu0 0.0
        %362 = vmatpush.msra.mxu0 0.0
        %363 = vmatpush.msra.mxu0 0.0
        %364 = vmatpush.msra.mxu0 0.0
        %365 = vmatpush.msra.mxu0 0.0
        %366 = vmatpush.msra.mxu0 0.0
        %367 = vmatpush.msra.mxu0 0.0
        %368 = vmatpush.msra.mxu0 0.0
        %369 = vmatpush.msra.mxu0 0.0
        %370 = vmatpush.msra.mxu0 0.0
        %371 = vmatpush.msra.mxu0 %v350
        %372 = vmatpush.msra.mxu0 %v349
        %373 = vmatpush.msra.mxu0 %v348
        %374 = vmatpush.msra.mxu0 %v347
        %375 = vmatmul.f32.gmra.mxu0 %v357
        %v376 = vpop.f32.mrf.mxu0
        %v377 = vadd.f32 %v353, %v376
        %378 = vdwg.mxu0
        %v379 = vmax.f32 %v377, 0.0
        %v380 = vld [vmem:[#allocation7] sm:$0xff]
        %v381 = vld [vmem:[#allocation7 + $0x8] sm:$0xff]
        %v382 = vld [vmem:[#allocation7 + $0x10] sm:$0xff]
        %v383 = vld [vmem:[#allocation7 + $0x18] sm:$0xff]
        %v384 = vld [vmem:[#allocation7 + $0x20] sm:$0xff]
        %v385 = vld [vmem:[#allocation7 + $0x28] sm:$0xff]
        %v386 = vld [vmem:[#allocation7 + $0x30] sm:$0xff]
        %v387 = vld [vmem:[#allocation7 + $0x38] sm:$0xff]
        %v388 = vld [vmem:[#allocation7 + $0x40] sm:$0xff]
        %v389 = vld [vmem:[#allocation7 + $0x48] sm:$0xff]
        %v390 = vld [vmem:[#allocation7 + $0x50] sm:$0xff]
        %v391 = vld [vmem:[#allocation7 + $0x58] sm:$0xff]
        %v392 = vld [vmem:[#allocation7 + $0x60] sm:$0xff]
        %v393 = vld [vmem:[#allocation7 + $0x68] sm:$0xff]
        %v394 = vld [vmem:[#allocation7 + $0x70] sm:$0xff]
        %v395 = vld [vmem:[#allocation7 + $0x78] sm:$0xff]
        %v396 = vld [vmem:[%s4] sm:$0x1]
        %v398 = vperm.slane %v396, 0
        %400 = vmatpush.msra.mxu0 %v395
        %401 = vmatpush.msra.mxu0 %v394
        %402 = vmatpush.msra.mxu0 %v393
        %403 = vmatpush.msra.mxu0 %v392
        %404 = vmatpush.msra.mxu0 %v391
        %405 = vmatpush.msra.mxu0 %v390
        %406 = vmatpush.msra.mxu0 %v389
        %407 = vmatpush.msra.mxu0 %v388
        %408 = vmatpush.msra.mxu0 %v387
        %409 = vmatpush.msra.mxu0 %v386
        %410 = vmatpush.msra.mxu0 %v385
        %411 = vmatpush.msra.mxu0 %v384
        %412 = vmatpush.msra.mxu0 %v383
        %413 = vmatpush.msra.mxu0 %v382
        %414 = vmatpush.msra.mxu0 %v381
        %415 = vmatpush.msra.mxu0 %v380
        %416 = vmatmul.f32.gmra.mxu0 %v379
        %v417 = vpop.f32.mrf.mxu0
        %v418 = vadd.f32 %v398, %v417
        %419 = vdwg.mxu0
        %v420 = vmul.f32 %v418, %v418
        %421 = vadd.xlane.f32.xlu0 %v420
        %v422 = vpop.xlane.xlu0 %421
        %v423 = vld [vmem:[#allocation8] sm:$0xff]
        %v424 = vld [vmem:[#allocation8 + $0x8] sm:$0xff]
        %v425 = vld [vmem:[#allocation8 + $0x10] sm:$0xff]
        %v426 = vld [vmem:[#allocation8 + $0x18] sm:$0xff]
        %v427 = vld [vmem:[#allocation8 + $0x20] sm:$0xff]
        %v428 = vld [vmem:[#allocation8 + $0x28] sm:$0xff]
        %v429 = vld [vmem:[#allocation8 + $0x30] sm:$0xff]
        %v430 = vld [vmem:[#allocation8 + $0x38] sm:$0xff]
        %v431 = vld [vmem:[#allocation8 + $0x40] sm:$0xff]
        %v432 = vld [vmem:[#allocation8 + $0x48] sm:$0xff]
        %v433 = vld [vmem:[#allocation8 + $0x50] sm:$0xff]
        %v434 = vld [vmem:[#allocation8 + $0x58] sm:$0xff]
        %v435 = vld [vmem:[#allocation8 + $0x60] sm:$0xff]
        %v436 = vld [vmem:[#allocation8 + $0x68] sm:$0xff]
        %v437 = vld [vmem:[#allocation8 + $0x70] sm:$0xff]
        %v438 = vld [vmem:[#allocation8 + $0x78] sm:$0xff]
        %439 = vmatpush.msra.mxu0 %v438
        %440 = vmatpush.msra.mxu0 %v437
        %441 = vmatpush.msra.mxu0 %v436
        %442 = vmatpush.msra.mxu0 %v435
        %443 = vmatpush.msra.mxu0 %v434
        %444 = vmatpush.msra.mxu0 %v433
        %445 = vmatpush.msra.mxu0 %v432
        %446 = vmatpush.msra.mxu0 %v431
        %447 = vmatpush.msra.mxu0 %v430
        %448 = vmatpush.msra.mxu0 %v429
        %449 = vmatpush.msra.mxu0 %v428
        %450 = vmatpush.msra.mxu0 %v427
        %451 = vmatpush.msra.mxu0 %v426
        %452 = vmatpush.msra.mxu0 %v425
        %453 = vmatpush.msra.mxu0 %v424
        %454 = vmatpush.msra.mxu0 %v423
        %455 = vmatmul.f32.gmra.mxu0 %v418
        %v456 = vpop.f32.mrf.mxu0
        %v457 = vadd.f32 0.0, %v456
        %458 = vdwg.mxu0
        %v459 = vld [vmem:[%s6] sm:$0x1]
        %v461 = vperm.slane %v459, 0
        %v463 = vadd.f32 %v422, %v461
        %v464 = vmul.f32 %v457, 2.0
        %v465 = vsub.f32 %v463, %v464
        %v466 = vmax.f32 %v465, 0.0
        %v467 = vadd.f32 %v466, 1.0
        %v468 = vrcp.pop %v467
        %v469 = vmul.f32 %v467, %v468
        %v470 = vsub.f32 2.0, %v469
        %v471 = vmul.f32 %v468, %v470
        %472 = vadd.xlane.f32.xlu0 %v471
        %v473 = vpop.xlane.xlu0 %472
        %v474 = vrcp.pop %v473
        %v475 = vmul.f32 %v473, %v474
        %v476 = vsub.f32 2.0, %v475
        %v477 = vmul.f32 %v474, %v476
        %v478 = vmul.f32 %v471, %v477
        %479 = vst [vmem:[%s345] sm:$0xff] %v478
        %s480 = sand.u32 %s186, 1
        %s481 = scalar_lea.sflag [#allocation4], %s480
        %s482 = sand.u32 %s186, 1
        %s483 = smul.addr %s482, 8
        %s484 = scalar_lea.vmem [#allocation10], %s483
        // Predicated region
        $region65: #{tpu_custom_call.1} parent=47 // pred_check
          %p485 = pneg %p196
        $region66: #{tpu_custom_call.1} parent=47 // pred_check_branch
          %487 = sbr.rel (%p485) target = $region68
        $region67: #{tpu_custom_call.1} parent=47 // pred_region
          %489 = vsyncadd %s481, 0
          %s490 = smul.addr %s26, 8
          %s491 = scalar_lea.hbm %s7, %s490
          %s493 = sshll.u32 %s484, 4
          %s494 = int_to_ptr.vmem [resolvable:$true] %s493
          %s495 = sshll.u32 %s491, 4
          %s496 = int_to_ptr.hbm [resolvable:$true] %s495
          %498 = dma.vmem_to_hbm [thread:$0]  %s494, 128, %s496, %s481
        $region68: #{tpu_custom_call.1} parent=47 // pred_fallthru
          _
      $region48: #{tpu_custom_call.1} parent=5 // pred_fallthru
        _
      %p499 = scmp.le.s32.totalorder 2, %s21
      // Predicated region
      $region69: #{tpu_custom_call.1} parent=5 // pred_check
        %p500 = pneg %p499
      $region70: #{tpu_custom_call.1} parent=5 // pred_check_branch
        %502 = sbr.rel (%p500) target = $region72
      $region71: #{tpu_custom_call.1} parent=5 // pred_region
        %s503 = ssub.s32 %s21, 2
        // Predicated region
        $region73: #{tpu_custom_call.1} parent=71 // pred_check
          %p504 = pneg %p202
        $region74: #{tpu_custom_call.1} parent=71 // pred_check_branch
          %506 = sbr.rel (%p504) target = $region76
        $region75: #{tpu_custom_call.1} parent=71 // pred_region
          %s507 = sand.u32 %s187, 1
          %s508 = scalar_lea.sflag [#allocation4], %s507
          %s509 = sand.u32 %s187, 1
          %s510 = smul.addr %s509, 8
          %s511 = scalar_lea.vmem [#allocation10], %s510
          %513 = dma.done %s508, 128
        $region76: #{tpu_custom_call.1} parent=71 // pred_fallthru
          _
      $region72: #{tpu_custom_call.1} parent=5 // pred_fallthru
        _
    $region6: #{tpu_custom_call.1} parent=1 // loop_footer
      %s25 = sadd.s32 1, %s21
    $region7: #{tpu_custom_call.1} parent=1 // loop_footer_branch
      %20 = sbr.rel target = $region3
    $region8: #{tpu_custom_call.1} parent=1 // loop_exit
      _
    %514 = vsyncpa [#allocation3], 1
    %s515 = scalar_lea.sflag [#allocation3], 1
    %516 = vsyncpa %s515, 1
    %517 = vsyncpa [#allocation6], 1
    %518 = vsyncpa [#allocation9], 1
    %519 = vsyncpa [#allocation4], 1
    %s520 = scalar_lea.sflag [#allocation4], 1
    %521 = vsyncpa %s520, 1

// kernel: tpu_custom_call.1
$region0: #{tpu_custom_call.1}
  #allocation0 [shape = 'u32[]', space=smem, size = 0x4, offset = 0x4, fixed_abs, tag = 'smem constant byte address 0x4 - core index']
  #allocation1 [shape = 'u32[72,128]{1,0:T(1,128)}', space=vmem, size = 0x9000, scoped, tag = 'internal scratch']
  %s0 = inlined_call_operand.hbm [shape: f32[16,32], index: 0, kind: input, shape index: {}]
  %s1 = inlined_call_operand.hbm [shape: f32[32,128], index: 1, kind: input, shape index: {}]
  %s2 = inlined_call_operand.vmem [shape: f32[1,128], index: 2, kind: input, shape index: {}]
  %s3 = inlined_call_operand.hbm [shape: f32[128,128], index: 3, kind: input, shape index: {}]
  %s4 = inlined_call_operand.vmem [shape: f32[1,128], index: 4, kind: input, shape index: {}]
  %s5 = inlined_call_operand.hbm [shape: f32[128,128], index: 5, kind: input, shape index: {}]
  %s6 = inlined_call_operand.vmem [shape: f32[1,128], index: 6, kind: input, shape index: {}]
  %s7 = inlined_call_operand.hbm [shape: f32[16,128], index: 7, kind: output, shape index: {}]
  %s8 = sld [smem:[#allocation0]]
  $region77: #{tpu_custom_call.1} parent=0
    _
  %s10 = ssub.s32 1, %s8
  %s11 = scalar_select 0, %s10, %s8
  $region1: #{tpu_custom_call.1} parent=0
    #allocation2 [shape = 'u8[8192]{0}', space=vmem, size = 0x2000, scoped, tag = 'input window, operand 0']
    #allocation3 [shape = 's32[2]{0}', space=sflag, size = 0x8, scoped, tag = 'scoped memory for tpu_custom_call.1']
    #allocation4 [shape = 's32[2]{0}', space=sflag, size = 0x8, scoped, tag = 'scoped memory for tpu_custom_call.1']
    #allocation5 [shape = 'u8[16384]{0}', space=vmem, size = 0x4000, scoped, tag = 'input window, operand 1, single buffered']
    #allocation6 [shape = 's32[1]{0}', space=sflag, size = 0x4, scoped, tag = 'scoped memory for tpu_custom_call.1']
    #allocation7 [shape = 'u8[65536]{0}', space=vmem, size = 0x10000, scoped, tag = 'input window, operand 3, single buffered']
    #allocation8 [shape = 'u8[65536]{0}', space=vmem, size = 0x10000, scoped, tag = 'input window, operand 5, single buffered']
    #allocation9 [shape = 's32[1]{0}', space=sflag, size = 0x4, scoped, tag = 'scoped memory for tpu_custom_call.1']
    #allocation10 [shape = 'u8[8192]{0}', space=vmem, size = 0x2000, scoped, tag = 'output window, operand 0']
    %12 = vsyncpa [#allocation3], 0
    %s13 = scalar_lea.sflag [#allocation3], 1
    %14 = vsyncpa %s13, 0
    %15 = vsyncpa [#allocation6], 0
    %16 = vsyncpa [#allocation9], 0
    %17 = vsyncpa [#allocation4], 0
    %s18 = scalar_lea.sflag [#allocation4], 1
    %19 = vsyncpa %s18, 0
    loop: start=0, step=1, limit=4
    $region2: #{tpu_custom_call.1} parent=1 // loop_pre_header
      _
    $region3: #{tpu_custom_call.1} parent=1 // loop_header
      %s21 = sphi 0, %s25
      %p22 = scmp.ge.s32.totalorder %s21, 4
      %s31 = sphi 0, %s33
      %s34 = sphi 0, %s31
      %s35 = sphi 0, %s34
      %s51 = sphi 0, %s35
      %s55 = sphi 0, %s55
      %s57 = sphi 0, %s55
      %s58 = sphi 0, %s57
      %s72 = sphi 0, %s58
      %s76 = sphi 0, %s76
      %s78 = sphi 0, %s76
      %s79 = sphi 0, %s78
      %s93 = sphi 0, %s79
      %s97 = sphi 0, %s97
      %s99 = sphi 0, %s97
      %s100 = sphi 0, %s99
      %s114 = sphi 0, %s100
      %s118 = sphi 0, %s118
      %s120 = sphi 0, %s118
      %s121 = sphi 0, %s120
      %s135 = sphi 0, %s121
      %s139 = sphi 0, %s139
      %s141 = sphi 0, %s139
      %s142 = sphi 0, %s141
      %s156 = sphi 0, %s142
      %s160 = sphi 0, %s160
      %s162 = sphi 0, %s160
      %s163 = sphi 0, %s162
      %s177 = sphi 0, %s163
      %s183 = sphi 0, %s185
      %s186 = sphi 0, %s183
      %s187 = sphi 0, %s186
      %s203 = sphi 0, %s187
    $region4: #{tpu_custom_call.1} parent=1 // loop_header_branch
      %24 = sbr.rel (%p22) target = $region8
    $region5: #{tpu_custom_call.1} parent=1 // loop_body
      %s26 = ssub.s32 %s21, 1
      %s27 = ssub.s32 %s21, 2
      %s28 = sadd.s32 %s21, 1
      %s29 = ssub.s32 %s21, %s28
      %p30 = scmp.eq.s32.totalorder %s29, 0
      %s32 = sadd.s32 %s31, 1
      %s33 = scalar_select %p30, %s31, %s32
      %p36 = pneg %p30
      %p37 = scmp.eq.s32.totalorder %s21, 1
      %p38 = por %p36, %p37
      %p39 = scmp.ne.s32.totalorder %s31, %s34
      %p40 = scmp.eq.s32.totalorder %s21, 0
      %p41 = por %p39, %p40
      %p42 = scmp.ne.s32.totalorder %s31, %s34
      %p43 = scmp.eq.s32.totalorder %s26, 1
      %p44 = por %p42, %p43
      %p45 = scmp.ne.s32.totalorder %s34, %s35
      %p46 = scmp.eq.s32.totalorder %s26, 0
      %p47 = por %p45, %p46
      %p48 = scmp.ne.s32.totalorder %s34, %s35
      %p49 = scmp.eq.s32.totalorder %s27, 1
      %p50 = por %p48, %p49
      %p52 = scmp.ne.s32.totalorder %s35, %s51
      %p53 = scmp.eq.s32.totalorder %s27, 0
      %p54 = por %p52, %p53
      %s56 = sadd.s32 %s55, 1
      %p59 = scmp.eq.s32.totalorder %s21, 1
      %p60 = scmp.ne.s32.totalorder %s55, %s57
      %p61 = scmp.eq.s32.totalorder %s21, 0
      %p62 = por %p60, %p61
      %p63 = scmp.ne.s32.totalorder %s55, %s57
      %p64 = scmp.eq.s32.totalorder %s26, 1
      %p65 = por %p63, %p64
      %p66 = scmp.ne.s32.totalorder %s57, %s58
      %p67 = scmp.eq.s32.totalorder %s26, 0
      %p68 = por %p66, %p67
      %p69 = scmp.ne.s32.totalorder %s57, %s58
      %p70 = scmp.eq.s32.totalorder %s27, 1
      %p71 = por %p69, %p70
      %p73 = scmp.ne.s32.totalorder %s58, %s72
      %p74 = scmp.eq.s32.totalorder %s27, 0
      %p75 = por %p73, %p74
      %s77 = sadd.s32 %s76, 1
      %p80 = scmp.eq.s32.totalorder %s21, 1
      %p81 = scmp.ne.s32.totalorder %s76, %s78
      %p82 = scmp.eq.s32.totalorder %s21, 0
      %p83 = por %p81, %p82
      %p84 = scmp.ne.s32.totalorder %s76, %s78
      %p85 = scmp.eq.s32.totalorder %s26, 1
      %p86 = por %p84, %p85
      %p87 = scmp.ne.s32.totalorder %s78, %s79
      %p88 = scmp.eq.s32.totalorder %s26, 0
      %p89 = por %p87, %p88
      %p90 = scmp.ne.s32.totalorder %s78, %s79
      %p91 = scmp.eq.s32.totalorder %s27, 1
      %p92 = por %p90, %p91
      %p94 = scmp.ne.s32.totalorder %s79, %s93
      %p95 = scmp.eq.s32.totalorder %s27, 0
      %p96 = por %p94, %p95
      %s98 = sadd.s32 %s97, 1
      %p101 = scmp.eq.s32.totalorder %s21, 1
      %p102 = scmp.ne.s32.totalorder %s97, %s99
      %p103 = scmp.eq.s32.totalorder %s21, 0
      %p104 = por %p102, %p103
      %p105 = scmp.ne.s32.totalorder %s97, %s99
      %p106 = scmp.eq.s32.totalorder %s26, 1
      %p107 = por %p105, %p106
      %p108 = scmp.ne.s32.totalorder %s99, %s100
      %p109 = scmp.eq.s32.totalorder %s26, 0
      %p110 = por %p108, %p109
      %p111 = scmp.ne.s32.totalorder %s99, %s100
      %p112 = scmp.eq.s32.totalorder %s27, 1
      %p113 = por %p111, %p112
      %p115 = scmp.ne.s32.totalorder %s100, %s114
      %p116 = scmp.eq.s32.totalorder %s27, 0
      %p117 = por %p115, %p116
      %s119 = sadd.s32 %s118, 1
      %p122 = scmp.eq.s32.totalorder %s21, 1
      %p123 = scmp.ne.s32.totalorder %s118, %s120
      %p124 = scmp.eq.s32.totalorder %s21, 0
      %p125 = por %p123, %p124
      %p126 = scmp.ne.s32.totalorder %s118, %s120
      %p127 = scmp.eq.s32.totalorder %s26, 1
      %p128 = por %p126, %p127
      %p129 = scmp.ne.s32.totalorder %s120, %s121
      %p130 = scmp.eq.s32.totalorder %s26, 0
      %p131 = por %p129, %p130
      %p132 = scmp.ne.s32.totalorder %s120, %s121
      %p133 = scmp.eq.s32.totalorder %s27, 1
      %p134 = por %p132, %p133
      %p136 = scmp.ne.s32.totalorder %s121, %s135
      %p137 = scmp.eq.s32.totalorder %s27, 0
      %p138 = por %p136, %p137
      %s140 = sadd.s32 %s139, 1
      %p143 = scmp.eq.s32.totalorder %s21, 1
      %p144 = scmp.ne.s32.totalorder %s139, %s141
      %p145 = scmp.eq.s32.totalorder %s21, 0
      %p146 = por %p144, %p145
      %p147 = scmp.ne.s32.totalorder %s139, %s141
      %p148 = scmp.eq.s32.totalorder %s26, 1
      %p149 = por %p147, %p148
      %p150 = scmp.ne.s32.totalorder %s141, %s142
      %p151 = scmp.eq.s32.totalorder %s26, 0
      %p152 = por %p150, %p151
      %p153 = scmp.ne.s32.totalorder %s141, %s142
      %p154 = scmp.eq.s32.totalorder %s27, 1
      %p155 = por %p153, %p154
      %p157 = scmp.ne.s32.totalorder %s142, %s156
      %p158 = scmp.eq.s32.totalorder %s27, 0
      %p159 = por %p157, %p158
      %s161 = sadd.s32 %s160, 1
      %p164 = scmp.eq.s32.totalorder %s21, 1
      %p165 = scmp.ne.s32.totalorder %s160, %s162
      %p166 = scmp.eq.s32.totalorder %s21, 0
      %p167 = por %p165, %p166
      %p168 = scmp.ne.s32.totalorder %s160, %s162
      %p169 = scmp.eq.s32.totalorder %s26, 1
      %p170 = por %p168, %p169
      %p171 = scmp.ne.s32.totalorder %s162, %s163
      %p172 = scmp.eq.s32.totalorder %s26, 0
      %p173 = por %p171, %p172
      %p174 = scmp.ne.s32.totalorder %s162, %s163
      %p175 = scmp.eq.s32.totalorder %s27, 1
      %p176 = por %p174, %p175
      %p178 = scmp.ne.s32.totalorder %s163, %s177
      %p179 = scmp.eq.s32.totalorder %s27, 0
      %p180 = por %p178, %p179
      %s181 = ssub.s32 %s21, %s28
      %p182 = scmp.eq.s32.totalorder %s181, 0
      %s184 = sadd.s32 %s183, 1
      %s185 = scalar_select %p182, %s183, %s184
      %p188 = pneg %p182
      %p189 = scmp.eq.s32.totalorder %s21, 1
      %p190 = por %p188, %p189
      %p191 = scmp.ne.s32.totalorder %s183, %s186
      %p192 = scmp.eq.s32.totalorder %s21, 0
      %p193 = por %p191, %p192
      %p194 = scmp.ne.s32.totalorder %s183, %s186
      %p195 = scmp.eq.s32.totalorder %s26, 1
      %p196 = por %p194, %p195
      %p197 = scmp.ne.s32.totalorder %s186, %s187
      %p198 = scmp.eq.s32.totalorder %s26, 0
      %p199 = por %p197, %p198
      %p200 = scmp.ne.s32.totalorder %s186, %s187
      %p201 = scmp.eq.s32.totalorder %s27, 1
      %p202 = por %p200, %p201
      %p204 = scmp.ne.s32.totalorder %s187, %s203
      %p205 = scmp.eq.s32.totalorder %s27, 0
      %p206 = por %p204, %p205
      %p207 = scmp.le.s32.totalorder 1, %s21
      %p208 = scmp.lt.s32.totalorder %s21, 3
      %p209 = pnand %p207, %p208
      %p210 = pneg %p209
      // Predicated region
      $region9: #{tpu_custom_call.1} parent=5 // pred_check
        _
      $region10: #{tpu_custom_call.1} parent=5 // pred_check_branch
        %212 = sbr.rel (%p209) target = $region12
      $region11: #{tpu_custom_call.1} parent=5 // pred_region
        %s213 = ssub.s32 %s21, 1
        // Predicated region
        $region13: #{tpu_custom_call.1} parent=11 // pred_check
          %p214 = pneg %p68
        $region14: #{tpu_custom_call.1} parent=11 // pred_check_branch
          %216 = sbr.rel (%p214) target = $region16
        $region15: #{tpu_custom_call.1} parent=11 // pred_region
          %218 = vsyncadd [#allocation6], 0
          %s219 = sshll.u32 %s1, 4
          %s220 = int_to_ptr.hbm [resolvable:$true] %s219
          %s221 = sshll.u32 [#allocation5], 4
          %s222 = int_to_ptr.vmem [resolvable:$true] %s221
          %227 = dma.hbm_to_vmem [thread:$0]  %s220, 512, %s222, [#allocation6], 128, 128, 8
        $region16: #{tpu_custom_call.1} parent=11 // pred_fallthru
          _
        // Predicated region
        $region17: #{tpu_custom_call.1} parent=11 // pred_check
          %p228 = pneg %p89
        $region18: #{tpu_custom_call.1} parent=11 // pred_check_branch
          %230 = sbr.rel (%p228) target = $region20
        $region19: #{tpu_custom_call.1} parent=11 // pred_region
          _
        $region20: #{tpu_custom_call.1} parent=11 // pred_fallthru
          _
        // Predicated region
        $region21: #{tpu_custom_call.1} parent=11 // pred_check
          %p231 = pneg %p110
        $region22: #{tpu_custom_call.1} parent=11 // pred_check_branch
          %233 = sbr.rel (%p231) target = $region24
        $region23: #{tpu_custom_call.1} parent=11 // pred_region
          %235 = vsyncadd [#allocation6], 0
          %s236 = sshll.u32 %s3, 4
          %s237 = int_to_ptr.hbm [resolvable:$true] %s236
          %s238 = sshll.u32 [#allocation7], 4
          %s239 = int_to_ptr.vmem [resolvable:$true] %s238
          %244 = dma.hbm_to_vmem [thread:$0]  %s237, 2048, %s239, [#allocation6], 128, 128, 8
        $region24: #{tpu_custom_call.1} parent=11 // pred_fallthru
          _
        // Predicated region
        $region25: #{tpu_custom_call.1} parent=11 // pred_check
          %p245 = pneg %p131
        $region26: #{tpu_custom_call.1} parent=11 // pred_check_branch
          %247 = sbr.rel (%p245) target = $region28
        $region27: #{tpu_custom_call.1} parent=11 // pred_region
          _
        $region28: #{tpu_custom_call.1} parent=11 // pred_fallthru
          _
        // Predicated region
        $region29: #{tpu_custom_call.1} parent=11 // pred_check
          %p248 = pneg %p152
        $region30: #{tpu_custom_call.1} parent=11 // pred_check_branch
          %250 = sbr.rel (%p248) target = $region32
        $region31: #{tpu_custom_call.1} parent=11 // pred_region
          %252 = vsyncadd [#allocation9], 0
          %s253 = sshll.u32 %s5, 4
          %s254 = int_to_ptr.hbm [resolvable:$true] %s253
          %s255 = sshll.u32 [#allocation8], 4
          %s256 = int_to_ptr.vmem [resolvable:$true] %s255
          %261 = dma.hbm_to_vmem [thread:$0]  %s254, 2048, %s256, [#allocation9], 128, 128, 8
        $region32: #{tpu_custom_call.1} parent=11 // pred_fallthru
          _
        // Predicated region
        $region33: #{tpu_custom_call.1} parent=11 // pred_check
          %p262 = pneg %p173
        $region34: #{tpu_custom_call.1} parent=11 // pred_check_branch
          %264 = sbr.rel (%p262) target = $region36
        $region35: #{tpu_custom_call.1} parent=11 // pred_region
          _
        $region36: #{tpu_custom_call.1} parent=11 // pred_fallthru
          _
      $region12: #{tpu_custom_call.1} parent=5 // pred_fallthru
        _
      %p265 = scmp.lt.s32.totalorder %s21, 2
      // Predicated region
      $region37: #{tpu_custom_call.1} parent=5 // pred_check
        %p266 = pneg %p265
      $region38: #{tpu_custom_call.1} parent=5 // pred_check_branch
        %268 = sbr.rel (%p266) target = $region40
      $region39: #{tpu_custom_call.1} parent=5 // pred_region
        // Predicated region
        $region41: #{tpu_custom_call.1} parent=39 // pred_check
          %p269 = pneg %p41
        $region42: #{tpu_custom_call.1} parent=39 // pred_check_branch
          %271 = sbr.rel (%p269) target = $region44
        $region43: #{tpu_custom_call.1} parent=39 // pred_region
          %s272 = sand.u32 %s31, 1
          %s273 = scalar_lea.sflag [#allocation3], %s272
          %s274 = sand.u32 %s31, 1
          %s275 = smul.addr %s274, 8
          %s276 = scalar_lea.vmem [#allocation2], %s275
          %278 = vsyncadd %s273, 0
          %s279 = smul.addr %s21, 8
          %s280 = scalar_lea.hbm %s0, %s279
          %s282 = sshll.u32 %s280, 4
          %s283 = int_to_ptr.hbm [resolvable:$true] %s282
          %s284 = sshll.u32 %s276, 4
          %s285 = int_to_ptr.vmem [resolvable:$true] %s284
          %287 = dma.hbm_to_vmem [thread:$0]  %s283, 128, %s285, %s273
        $region44: #{tpu_custom_call.1} parent=39 // pred_fallthru
          _
      $region40: #{tpu_custom_call.1} parent=5 // pred_fallthru
        _
      %p288 = scmp.le.s32.totalorder 1, %s21
      %p289 = scmp.lt.s32.totalorder %s21, 3
      %p290 = pnand %p288, %p289
      %p291 = pneg %p290
      // Predicated region
      $region45: #{tpu_custom_call.1} parent=5 // pred_check
        _
      $region46: #{tpu_custom_call.1} parent=5 // pred_check_branch
        %293 = sbr.rel (%p290) target = $region48
      $region47: #{tpu_custom_call.1} parent=5 // pred_region
        %s294 = ssub.s32 %s21, 1
        %s295 = sand.u32 %s34, 1
        %s296 = scalar_lea.sflag [#allocation3], %s295
        %s297 = sand.u32 %s34, 1
        %s298 = smul.addr %s297, 8
        %s299 = scalar_lea.vmem [#allocation2], %s298
        // Predicated region
        $region49: #{tpu_custom_call.1} parent=47 // pred_check
          %p300 = pneg %p47
        $region50: #{tpu_custom_call.1} parent=47 // pred_check_branch
          %302 = sbr.rel (%p300) target = $region52
        $region51: #{tpu_custom_call.1} parent=47 // pred_region
          %304 = dma.done %s296, 128
        $region52: #{tpu_custom_call.1} parent=47 // pred_fallthru
          _
        // Predicated region
        $region53: #{tpu_custom_call.1} parent=47 // pred_check
          %p305 = pneg %p68
        $region54: #{tpu_custom_call.1} parent=47 // pred_check_branch
          %307 = sbr.rel (%p305) target = $region56
        $region55: #{tpu_custom_call.1} parent=47 // pred_region
          %309 = dma.done [#allocation6], 512
        $region56: #{tpu_custom_call.1} parent=47 // pred_fallthru
          _
        // Predicated region
        $region57: #{tpu_custom_call.1} parent=47 // pred_check
          %p310 = pneg %p110
        $region58: #{tpu_custom_call.1} parent=47 // pred_check_branch
          %312 = sbr.rel (%p310) target = $region60
        $region59: #{tpu_custom_call.1} parent=47 // pred_region
          %314 = dma.done [#allocation6], 2048
        $region60: #{tpu_custom_call.1} parent=47 // pred_fallthru
          _
        // Predicated region
        $region61: #{tpu_custom_call.1} parent=47 // pred_check
          %p315 = pneg %p152
        $region62: #{tpu_custom_call.1} parent=47 // pred_check_branch
          %317 = sbr.rel (%p315) target = $region64
        $region63: #{tpu_custom_call.1} parent=47 // pred_region
          %319 = dma.done [#allocation9], 2048
        $region64: #{tpu_custom_call.1} parent=47 // pred_fallthru
          _
        %s320 = sand.u32 %s34, 1
        %s321 = scalar_lea.sflag [#allocation3], %s320
        %s322 = sand.u32 %s34, 1
        %s323 = smul.addr %s322, 8
        %s324 = scalar_lea.vmem [#allocation2], %s323
        %p325 = pneg %p47
        %p326 = pneg %p44
        %p327 = pneg %p68
        %p328 = pneg %p65
        %p329 = pneg %p89
        %p330 = pneg %p86
        %p331 = pneg %p110
        %p332 = pneg %p107
        %p333 = pneg %p131
        %p334 = pneg %p128
        %p335 = pneg %p152
        %p336 = pneg %p149
        %p337 = pneg %p173
        %p338 = pneg %p170
        %p339 = pneg %p199
        %p340 = pneg %p196
        %s341 = sand.u32 %s186, 1
        %s342 = scalar_lea.sflag [#allocation4], %s341
        %s343 = sand.u32 %s186, 1
        %s344 = smul.addr %s343, 8
        %s345 = scalar_lea.vmem [#allocation10], %s344
        %v346 = vld [vmem:[%s299] sm:$0xff]
        %v347 = vld [vmem:[#allocation5] sm:$0xff]
        %v348 = vld [vmem:[#allocation5 + $0x8] sm:$0xff]
        %v349 = vld [vmem:[#allocation5 + $0x10] sm:$0xff]
        %v350 = vld [vmem:[#allocation5 + $0x18] sm:$0xff]
        %v351 = vld [vmem:[%s2] sm:$0x1]
        %v353 = vperm.slane %v351, 0
        %vm355 = vcmask 261120
        %v357 = vsel %vm355, %v346, 0
        %359 = vmatpush.msra.mxu0 0.0
        %360 = vmatpush.msra.mxu0 0.0
        %361 = vmatpush.msra.mxu0 0.0
        %362 = vmatpush.msra.mxu0 0.0
        %363 = vmatpush.msra.mxu0 0.0
        %364 = vmatpush.msra.mxu0 0.0
        %365 = vmatpush.msra.mxu0 0.0
        %366 = vmatpush.msra.mxu0 0.0
        %367 = vmatpush.msra.mxu0 0.0
        %368 = vmatpush.msra.mxu0 0.0
        %369 = vmatpush.msra.mxu0 0.0
        %370 = vmatpush.msra.mxu0 0.0
        %371 = vmatpush.msra.mxu0 %v350
        %372 = vmatpush.msra.mxu0 %v349
        %373 = vmatpush.msra.mxu0 %v348
        %374 = vmatpush.msra.mxu0 %v347
        %375 = vmatmul.f32.gmra.mxu0 %v357
        %v376 = vpop.f32.mrf.mxu0
        %v377 = vadd.f32 %v353, %v376
        %378 = vdwg.mxu0
        %v379 = vmax.f32 %v377, 0.0
        %v380 = vld [vmem:[#allocation7] sm:$0xff]
        %v381 = vld [vmem:[#allocation7 + $0x8] sm:$0xff]
        %v382 = vld [vmem:[#allocation7 + $0x10] sm:$0xff]
        %v383 = vld [vmem:[#allocation7 + $0x18] sm:$0xff]
        %v384 = vld [vmem:[#allocation7 + $0x20] sm:$0xff]
        %v385 = vld [vmem:[#allocation7 + $0x28] sm:$0xff]
        %v386 = vld [vmem:[#allocation7 + $0x30] sm:$0xff]
        %v387 = vld [vmem:[#allocation7 + $0x38] sm:$0xff]
        %v388 = vld [vmem:[#allocation7 + $0x40] sm:$0xff]
        %v389 = vld [vmem:[#allocation7 + $0x48] sm:$0xff]
        %v390 = vld [vmem:[#allocation7 + $0x50] sm:$0xff]
        %v391 = vld [vmem:[#allocation7 + $0x58] sm:$0xff]
        %v392 = vld [vmem:[#allocation7 + $0x60] sm:$0xff]
        %v393 = vld [vmem:[#allocation7 + $0x68] sm:$0xff]
        %v394 = vld [vmem:[#allocation7 + $0x70] sm:$0xff]
        %v395 = vld [vmem:[#allocation7 + $0x78] sm:$0xff]
        %v396 = vld [vmem:[%s4] sm:$0x1]
        %v398 = vperm.slane %v396, 0
        %400 = vmatpush.msra.mxu0 %v395
        %401 = vmatpush.msra.mxu0 %v394
        %402 = vmatpush.msra.mxu0 %v393
        %403 = vmatpush.msra.mxu0 %v392
        %404 = vmatpush.msra.mxu0 %v391
        %405 = vmatpush.msra.mxu0 %v390
        %406 = vmatpush.msra.mxu0 %v389
        %407 = vmatpush.msra.mxu0 %v388
        %408 = vmatpush.msra.mxu0 %v387
        %409 = vmatpush.msra.mxu0 %v386
        %410 = vmatpush.msra.mxu0 %v385
        %411 = vmatpush.msra.mxu0 %v384
        %412 = vmatpush.msra.mxu0 %v383
        %413 = vmatpush.msra.mxu0 %v382
        %414 = vmatpush.msra.mxu0 %v381
        %415 = vmatpush.msra.mxu0 %v380
        %416 = vmatmul.f32.gmra.mxu0 %v379
        %v417 = vpop.f32.mrf.mxu0
        %v418 = vadd.f32 %v398, %v417
        %419 = vdwg.mxu0
        %v420 = vmul.f32 %v418, %v418
        %421 = vadd.xlane.f32.xlu0 %v420
        %v422 = vpop.xlane.xlu0 %421
        %v423 = vld [vmem:[#allocation8] sm:$0xff]
        %v424 = vld [vmem:[#allocation8 + $0x8] sm:$0xff]
        %v425 = vld [vmem:[#allocation8 + $0x10] sm:$0xff]
        %v426 = vld [vmem:[#allocation8 + $0x18] sm:$0xff]
        %v427 = vld [vmem:[#allocation8 + $0x20] sm:$0xff]
        %v428 = vld [vmem:[#allocation8 + $0x28] sm:$0xff]
        %v429 = vld [vmem:[#allocation8 + $0x30] sm:$0xff]
        %v430 = vld [vmem:[#allocation8 + $0x38] sm:$0xff]
        %v431 = vld [vmem:[#allocation8 + $0x40] sm:$0xff]
        %v432 = vld [vmem:[#allocation8 + $0x48] sm:$0xff]
        %v433 = vld [vmem:[#allocation8 + $0x50] sm:$0xff]
        %v434 = vld [vmem:[#allocation8 + $0x58] sm:$0xff]
        %v435 = vld [vmem:[#allocation8 + $0x60] sm:$0xff]
        %v436 = vld [vmem:[#allocation8 + $0x68] sm:$0xff]
        %v437 = vld [vmem:[#allocation8 + $0x70] sm:$0xff]
        %v438 = vld [vmem:[#allocation8 + $0x78] sm:$0xff]
        %439 = vmatpush.msra.mxu0 %v438
        %440 = vmatpush.msra.mxu0 %v437
        %441 = vmatpush.msra.mxu0 %v436
        %442 = vmatpush.msra.mxu0 %v435
        %443 = vmatpush.msra.mxu0 %v434
        %444 = vmatpush.msra.mxu0 %v433
        %445 = vmatpush.msra.mxu0 %v432
        %446 = vmatpush.msra.mxu0 %v431
        %447 = vmatpush.msra.mxu0 %v430
        %448 = vmatpush.msra.mxu0 %v429
        %449 = vmatpush.msra.mxu0 %v428
        %450 = vmatpush.msra.mxu0 %v427
        %451 = vmatpush.msra.mxu0 %v426
        %452 = vmatpush.msra.mxu0 %v425
        %453 = vmatpush.msra.mxu0 %v424
        %454 = vmatpush.msra.mxu0 %v423
        %455 = vmatmul.f32.gmra.mxu0 %v418
        %v456 = vpop.f32.mrf.mxu0
        %v457 = vadd.f32 0.0, %v456
        %458 = vdwg.mxu0
        %v459 = vld [vmem:[%s6] sm:$0x1]
        %v461 = vperm.slane %v459, 0
        %v463 = vadd.f32 %v422, %v461
        %v464 = vmul.f32 %v457, 2.0
        %v465 = vsub.f32 %v463, %v464
        %v466 = vmax.f32 %v465, 0.0
        %v467 = vadd.f32 %v466, 1.0
        %v468 = vrcp.pop %v467
        %v469 = vmul.f32 %v467, %v468
        %v470 = vsub.f32 2.0, %v469
        %v471 = vmul.f32 %v468, %v470
        %472 = vadd.xlane.f32.xlu0 %v471
        %v473 = vpop.xlane.xlu0 %472
        %v474 = vrcp.pop %v473
        %v475 = vmul.f32 %v473, %v474
        %v476 = vsub.f32 2.0, %v475
        %v477 = vmul.f32 %v474, %v476
        %v478 = vmul.f32 %v471, %v477
        %479 = vst [vmem:[%s345] sm:$0xff] %v478
        %s480 = sand.u32 %s186, 1
        %s481 = scalar_lea.sflag [#allocation4], %s480
        %s482 = sand.u32 %s186, 1
        %s483 = smul.addr %s482, 8
        %s484 = scalar_lea.vmem [#allocation10], %s483
        // Predicated region
        $region65: #{tpu_custom_call.1} parent=47 // pred_check
          %p485 = pneg %p196
        $region66: #{tpu_custom_call.1} parent=47 // pred_check_branch
          %487 = sbr.rel (%p485) target = $region68
        $region67: #{tpu_custom_call.1} parent=47 // pred_region
          %489 = vsyncadd %s481, 0
          %s490 = smul.addr %s26, 8
          %s491 = scalar_lea.hbm %s7, %s490
          %s493 = sshll.u32 %s484, 4
          %s494 = int_to_ptr.vmem [resolvable:$true] %s493
          %s495 = sshll.u32 %s491, 4
          %s496 = int_to_ptr.hbm [resolvable:$true] %s495
          %498 = dma.vmem_to_hbm [thread:$0]  %s494, 128, %s496, %s481
        $region68: #{tpu_custom_call.1} parent=47 // pred_fallthru
          _
      $region48: #{tpu_custom_call.1} parent=5 // pred_fallthru
        _
      %p499 = scmp.le.s32.totalorder 2, %s21
      // Predicated region
      $region69: #{tpu_custom_call.1} parent=5 // pred_check
        %p500 = pneg %p499
      $region70: #{tpu_custom_call.1} parent=5 // pred_check_branch
        %502 = sbr.rel (%p500) target = $region72
      $region71: #{tpu_custom_call.1} parent=5 // pred_region
        %s503 = ssub.s32 %s21, 2
        // Predicated region
        $region73: #{tpu_custom_call.1} parent=71 // pred_check
          %p504 = pneg %p202
        $region74: #{tpu_custom_call.1} parent=71 // pred_check_branch
          %506 = sbr.rel (%p504) target = $region76
        $region75: #{tpu_custom_call.1} parent=71 // pred_region
          %s507 = sand.u32 %s187, 1
          %s508 = scalar_lea.sflag [#allocation4], %s507
          %s509 = sand.u32 %s187, 1
          %s510 = smul.addr %s509, 8
          %s511 = scalar_lea.vmem [#allocation10], %s510
          %513 = dma.done %s508, 128
        $region76: #{tpu_custom_call.1} parent=71 // pred_fallthru
          _
      $region72: #{tpu_custom_call.1} parent=5 // pred_fallthru
        _
    $region6: #{tpu_custom_call.1} parent=1 // loop_footer
      %s25 = sadd.s32 1, %s21
    $region7: #{tpu_custom_call.1} parent=1 // loop_footer_branch
      %20 = sbr.rel target = $region3
    $region8: #{tpu_custom_call.1} parent=1 // loop_exit
      _
    %514 = vsyncpa [#allocation3], 1
    %s515 = scalar_lea.sflag [#allocation3], 1
    %516 = vsyncpa %s515, 1
    %517 = vsyncpa [#allocation6], 1
    %518 = vsyncpa [#allocation9], 1
    %519 = vsyncpa [#allocation4], 1
    %s520 = scalar_lea.sflag [#allocation4], 1
    %521 = vsyncpa %s520, 1

</llo_original>
